<compile_context>
chip_gen: v6e
topology: v6e:2x2x1
jax: 0.10.0
libtpu: 0.0.40
codegen_flags: <defaults>
</compile_context>

<pallas_src>
import jax
import jax.numpy as jnp
from jax import lax
from jax.experimental import pallas as pl
from jax.experimental.pallas import tpu as pltpu

COST_FEAT = 0.98
DET_THR = 0.3
COST_LIMIT = 0.8   # the module overrides the ctor arg with 0.8 (unused without lapjv)
EPS = 1e-8
INF = 1e10

AUX_ROWS = 8       # ref-side slab rows: 0..3 box^T, 4 ref_dist, 5 |box|^2, 6..7 pad
AUX_COLS = 8       # src-side slab cols: 0..3 box,   4 |box|^2,  5 low-det flag, 6..7 pad

MAX_TN = 512       # row tile (src queries)
MAX_TM = 1024      # col tile (references)


def _match_cost_kernel(src_feat_ref, id_feat_t_ref, src_aux_ref, ref_aux_ref, c_ref):
    # Features are pre-normalized (unit L2) in the wrapper, so cosine distance
    # is simply 1 - <src, id>; bf16 inputs, f32 accumulation on the MXU.
    dots = lax.dot_general(src_feat_ref[...], id_feat_t_ref[...],
                           (((1,), (0,)), ((), ())),
                           preferred_element_type=jnp.float32)          # [tn, tm]

    src_aux = src_aux_ref[...]                                          # [tn, 8] f32
    ref_aux = ref_aux_ref[...]                                          # [8, tm] f32

    cos_d = 1.0 - dots
    ref_dist = ref_aux[4:5, :]                                          # [1, tm]
    # clamp at 0: FP rounding can push the product slightly negative -> NaN in sqrt
    cost_feature = jnp.sqrt(jnp.maximum(ref_dist * cos_d, 0.0))         # [tn, tm]

    # --- box cdist via squared expansion; single tiny K=4 f32 MXU dot ---
    box_dot = lax.dot_general(src_aux[:, 0:4], ref_aux[0:4, :],
                              (((1,), (0,)), ((), ())),
                              preferred_element_type=jnp.float32)       # [tn, tm]
    dist_sq = src_aux[:, 4:5] + ref_aux[5:6, :] - 2.0 * box_dot
    cost_distance = jnp.sqrt(jnp.maximum(dist_sq, 0.0))

    c = COST_FEAT * cost_feature + (1.0 - COST_FEAT) * cost_distance
    # row mask precomputed in the wrapper (sigmoid(logit[...,1]) < DET_THR)
    c = jnp.where(src_aux[:, 5:6] > 0.5, INF, c)
    c_ref[...] = c


def _pick_row_tile(n):
    """Row tile: multiple of 16 (bf16 sublane packing), never larger than n."""
    if n < 16:
        return n                              # block dims == full array dims
    tn = min(MAX_TN, (n // 16) * 16)
    # v7x megacore: keep at least two row blocks when possible so both
    # TensorCores get work on the "parallel" row axis.
    if tn >= n and n >= 32:
        tn = 16 * ((n + 31) // 32)
    return tn


def _pick_col_tile(m):
    """Col tile: multiple of 128 (lane-dense stores), never larger than m."""
    if m < 128:
        return m                              # block dims == full array dims
    return min(MAX_TM, (m // 128) * 128)


@jax.jit
def _compute_cost(src_feat_bf16, id_feat_t_bf16, src_aux, ref_aux):
    n, d = src_feat_bf16.shape
    m = id_feat_t_bf16.shape[1]

    tn = _pick_row_tile(n)
    tm = _pick_col_tile(m)
    grid = (pl.cdiv(n, tn), pl.cdiv(m, tm))   # partial boundary blocks are masked

    return pl.pallas_call(
        _match_cost_kernel,
        out_shape=jax.ShapeDtypeStruct((n, m), jnp.float32),   # exact shape: no slice copy
        grid=grid,
        in_specs=[
            pl.BlockSpec((tn, d), lambda i, j: (i, 0)),          # src unit features (bf16)
            pl.BlockSpec((d, tm), lambda i, j: (0, j)),          # ref unit features^T (bf16)
            pl.BlockSpec((tn, AUX_COLS), lambda i, j: (i, 0)),   # src aux slab (f32)
            pl.BlockSpec((AUX_ROWS, tm), lambda i, j: (0, j)),   # ref aux slab (f32)
        ],
        out_specs=pl.BlockSpec((tn, tm), lambda i, j: (i, j)),
        compiler_params=pltpu.CompilerParams(
            dimension_semantics=("parallel", "parallel"),
            vmem_limit_bytes=48 * 1024 * 1024,   # fits v7x's 64 MiB VMEM with headroom
        ),
        cost_estimate=pl.CostEstimate(
            flops=2 * n * m * (d + 4),
            transcendentals=2 * n * m,
            bytes_accessed=(n * d + d * m) * 2
                           + (n * AUX_COLS + AUX_ROWS * m + n * m) * 4,
        ),
    )(src_feat_bf16, id_feat_t_bf16, src_aux, ref_aux)


def _box_xyxy_to_cxcywh(b):
    x0, y0, x1, y1 = b[:, 0], b[:, 1], b[:, 2], b[:, 3]
    return jnp.stack([(x0 + x1) * 0.5, (y0 + y1) * 0.5, x1 - x0, y1 - y0], axis=-1)


def match_track_cost(ref_outputs, outputs, references):
    """JAX glue reproducing MatchTrackMatcher.forward up to (and including) the
    cost matrix C; returns C with shape [bs, num_queries, total_refs]."""
    bs, num_queries = outputs['id_features'].shape[:2]
    d = outputs['id_features'].shape[-1]

    id_features = ref_outputs['ref_id_features'].reshape(-1, d).astype(jnp.float32)     # [M, D]
    pred_boxes = ref_outputs['ref_coords'].reshape(-1, 2).astype(jnp.float32)           # [M, 2]
    src_id_features = outputs['id_features'].reshape(-1, d).astype(jnp.float32)         # [N, D]
    src_boxes = outputs['pred_boxes'].reshape(-1, 4).astype(jnp.float32)                # [N, 4]
    logit1 = outputs['pred_logits'].reshape(
        -1, outputs['pred_logits'].shape[-1])[:, 1].astype(jnp.float32)                 # [N]

    ref_features = jnp.concatenate(
        [v['ref_features'] for v in references], axis=0).astype(jnp.float32)            # [M, D]
    ref_boxes6 = jnp.concatenate(
        [v['ref_boxes'] for v in references], axis=0).astype(jnp.float32)               # [M, 6]
    input_size = jnp.concatenate(
        [v['input_size'] for v in references], axis=0).astype(jnp.float32)              # [M, 2]
    scale = jnp.concatenate([input_size, input_size], axis=1)                           # [M, 4]

    pred_boxes = jnp.concatenate([pred_boxes - ref_boxes6[:, 2:4],
                                  pred_boxes + ref_boxes6[:, 4:6]], axis=-1)            # xyxy
    # (the torch code also rescales ref_boxes here; the result is unused downstream)
    pred_boxes = _box_xyxy_to_cxcywh(pred_boxes) * scale
    src_boxes = src_boxes * scale
    # NOTE: faithful to the torch module -- no epsilon guard on the height divide.
    pred_boxes = pred_boxes.at[:, 2].set(pred_boxes[:, 2] / pred_boxes[:, 3])
    src_boxes = src_boxes.at[:, 2].set(src_boxes[:, 2] / src_boxes[:, 3])

    # ---- hoisted ref-side precompute (depends only on M, done once) ----
    id_norm = jnp.sqrt(jnp.sum(id_features * id_features, axis=1))                      # [M]
    ref_norm = jnp.sqrt(jnp.sum(ref_features * ref_features, axis=1))                   # [M]
    id_dot_ref = jnp.sum(id_features * ref_features, axis=1)                            # [M]
    ref_dist = 1.0 - id_dot_ref / jnp.maximum(id_norm * ref_norm, EPS)                  # [M]
    pred_box_sq = jnp.sum(pred_boxes * pred_boxes, axis=1)                              # [M]

    # Pre-normalize features in f32 before the bf16 cast so the kernel's cosine
    # distance is just 1 - dot.  NOTE: per-vector clamp max(|x|, EPS) instead of
    # torch's clamp on the norm product; only differs for (near-)zero vectors.
    src_norm = jnp.sqrt(jnp.sum(src_id_features * src_id_features, axis=1, keepdims=True))
    src_unit = src_id_features / jnp.maximum(src_norm, EPS)                              # [N, D]
    id_unit = id_features / jnp.maximum(id_norm[:, None], EPS)                           # [M, D]

    m = id_features.shape[0]
    ref_aux = jnp.zeros((AUX_ROWS, m), jnp.float32)
    ref_aux = ref_aux.at[0:4, :].set(pred_boxes.T)
    ref_aux = ref_aux.at[4, :].set(ref_dist)
    ref_aux = ref_aux.at[5, :].set(pred_box_sq)

    # ---- src-side per-row scalars folded into one slab ----
    n = src_id_features.shape[0]
    src_box_sq = jnp.sum(src_boxes * src_boxes, axis=1)                                  # [N]
    low_det = (jax.nn.sigmoid(logit1) < DET_THR).astype(jnp.float32)                     # [N]

    src_aux = jnp.zeros((n, AUX_COLS), jnp.float32)
    src_aux = src_aux.at[:, 0:4].set(src_boxes)
    src_aux = src_aux.at[:, 4].set(src_box_sq)
    src_aux = src_aux.at[:, 5].set(low_det)

    c = _compute_cost(src_unit.astype(jnp.bfloat16),
                      id_unit.T.astype(jnp.bfloat16),                                   # [D, M]
                      src_aux, ref_aux)
    return c.reshape(bs, num_queries, -1)


def _reference_cost(src_feat, id_feat, ref_feat, src_boxes, pred_boxes, logit1):
    """Pure-JAX (f32) reference of the kernel math for a sanity check."""
    def cosd(x1, x2):
        w1 = jnp.linalg.norm(x1, axis=1, keepdims=True)
        w2 = jnp.linalg.norm(x2, axis=1, keepdims=True)
        return 1.0 - (x1 @ x2.T) / jnp.maximum(w1 * w2.T, EPS)

    ref_distance = jnp.diag(cosd(id_feat, ref_feat))
    cost_feature = jnp.sqrt(jnp.maximum(ref_distance[None, :] * cosd(src_feat, id_feat), 0.0))
    diff = src_boxes[:, None, :] - pred_boxes[None, :, :]
    cost_distance = jnp.sqrt(jnp.sum(diff * diff, axis=-1))
    c = COST_FEAT * cost_feature + (1.0 - COST_FEAT) * cost_distance
    out_prob = jax.nn.sigmoid(logit1)
    return jnp.where(out_prob < DET_THR, INF, c)


if __name__ == "__main__":
    key = jax.random.PRNGKey(0)
    bs, nq, D = 2, 8, 32          # total N = M = bs*nq = 16
    keys = jax.random.split(key, 8)

    ref_outputs = {
        'ref_id_features': jax.random.normal(keys[0], (bs, nq, D), jnp.float32),
        'ref_coords': jax.random.uniform(keys[1], (bs, nq, 2), jnp.float32, 0.2, 0.8),
    }
    outputs = {
        'id_features': jax.random.normal(keys[2], (bs, nq, D), jnp.float32),
        'pred_boxes': jnp.concatenate(
            [jax.random.uniform(keys[3], (bs, nq, 2), jnp.float32, 0.2, 0.8),
             jax.random.uniform(keys[4], (bs, nq, 2), jnp.float32, 0.05, 0.3)], axis=-1),
        'pred_logits': jax.random.normal(keys[5], (bs, nq, 2), jnp.float32),
    }
    references = []
    for b in range(bs):
        kk = jax.random.split(keys[6 + b], 3)
        centers = jax.random.uniform(kk[0], (nq, 2), jnp.float32, 0.2, 0.8)
        offsets = jax.random.uniform(kk[1], (nq, 4), jnp.float32, 0.05, 0.2)
        references.append({
            'ref_features': jax.random.normal(kk[2], (nq, D), jnp.float32),
            'ref_boxes': jnp.concatenate([centers, offsets], axis=-1),   # [nq, 6]
            'input_size': jnp.tile(jnp.array([[640.0, 480.0]], jnp.float32), (nq, 1)),
            'idx_map': jnp.arange(nq, dtype=jnp.int32),
        })

    C = match_track_cost(ref_outputs, outputs, references)
    C = jax.block_until_ready(C)
    assert C.shape == (bs, nq, bs * nq)

    # Sanity check against a pure-JAX f32 reference of the same math.
    d = D
    id_features = ref_outputs['ref_id_features'].reshape(-1, d)
    pred_boxes = ref_outputs['ref_coords'].reshape(-1, 2)
    src_id_features = outputs['id_features'].reshape(-1, d)
    src_boxes = outputs['pred_boxes'].reshape(-1, 4)
    logit1 = outputs['pred_logits'].reshape(-1, 2)[:, 1:2]
    ref_features = jnp.concatenate([v['ref_features'] for v in references], axis=0)
    ref_boxes6 = jnp.concatenate([v['ref_boxes'] for v in references], axis=0)
    input_size = jnp.concatenate([v['input_size'] for v in references], axis=0)
    scale = jnp.concatenate([input_size, input_size], axis=1)
    pred_boxes = jnp.concatenate([pred_boxes - ref_boxes6[:, 2:4],
                                  pred_boxes + ref_boxes6[:, 4:6]], axis=-1)
    pred_boxes = _box_xyxy_to_cxcywh(pred_boxes) * scale
    src_boxes = src_boxes * scale
    pred_boxes = pred_boxes.at[:, 2].set(pred_boxes[:, 2] / pred_boxes[:, 3])
    src_boxes = src_boxes.at[:, 2].set(src_boxes[:, 2] / src_boxes[:, 3])
    C_ref = _reference_cost(src_id_features, id_features, ref_features,
                            src_boxes, pred_boxes, logit1).reshape(bs, nq, -1)
    assert jnp.allclose(C, C_ref, rtol=2e-2, atol=2e-2), \
        f"max abs diff {jnp.max(jnp.abs(C - C_ref))}"

    print("KERNEL_OK")
</pallas_src>

<mosaic_0001>
module attributes {stable_mosaic.version = 11 : i64} {
  func.func @_match_cost_kernel(%arg0: i32, %arg1: i32, %arg2: memref<16x32xbf16, #tpu.memory_space<vmem>>, %arg3: memref<32x16xbf16, #tpu.memory_space<vmem>>, %arg4: memref<16x8xf32, #tpu.memory_space<vmem>>, %arg5: memref<8x16xf32, #tpu.memory_space<vmem>>, %arg6: memref<16x16xf32, #tpu.memory_space<vmem>>) attributes {dimension_semantics = [#tpu.dimension_semantics<parallel>, #tpu.dimension_semantics<parallel>], iteration_bounds = array<i64: 1, 1>, scalar_prefetch = 0 : i64, scratch_operands = 0 : i64, tpu.core_type = #tpu.core_type<tc>, window_params = [{transform_indices = @transform_0, window_bounds = array<i64: 16, 32>}, {transform_indices = @transform_1, window_bounds = array<i64: 32, 16>}, {transform_indices = @transform_2, window_bounds = array<i64: 16, 8>}, {transform_indices = @transform_3, window_bounds = array<i64: 8, 16>}, {transform_indices = @transform_4, window_bounds = array<i64: 16, 16>}]} {
    %c0 = arith.constant 0 : index
    %c0_0 = arith.constant 0 : index
    %0 = vector.load %arg2[%c0, %c0_0] : memref<16x32xbf16, #tpu.memory_space<vmem>>, vector<16x32xbf16>
    %c0_1 = arith.constant 0 : index
    %c0_2 = arith.constant 0 : index
    %1 = vector.load %arg3[%c0_1, %c0_2] : memref<32x16xbf16, #tpu.memory_space<vmem>>, vector<32x16xbf16>
    %cst = arith.constant dense<0.000000e+00> : vector<16x16xf32>
    %2 = tpu.matmul %0, %1, %cst {dimension_numbers = #tpu.dot_dimension_numbers<[1], [0], [0], [1], [0, 0, 1, 1], [], []>} : vector<16x32xbf16>, vector<32x16xbf16>, vector<16x16xf32> -> vector<16x16xf32>
    %c0_3 = arith.constant 0 : index
    %c0_4 = arith.constant 0 : index
    %3 = vector.load %arg4[%c0_3, %c0_4] : memref<16x8xf32, #tpu.memory_space<vmem>>, vector<16x8xf32>
    %c0_5 = arith.constant 0 : index
    %c0_6 = arith.constant 0 : index
    %4 = vector.load %arg5[%c0_5, %c0_6] : memref<8x16xf32, #tpu.memory_space<vmem>>, vector<8x16xf32>
    %cst_7 = arith.constant 1.000000e+00 : f32
    %5 = vector.broadcast %cst_7 : f32 to vector<16x16xf32>
    %6 = arith.subf %5, %2 : vector<16x16xf32>
    %7 = vector.extract_strided_slice %4 {offsets = [4, 0], sizes = [1, 16], strides = [1, 1]} : vector<8x16xf32> to vector<1x16xf32>
    %8 = vector.broadcast %7 : vector<1x16xf32> to vector<16x16xf32>
    %9 = arith.mulf %8, %6 : vector<16x16xf32>
    %cst_8 = arith.constant 0.000000e+00 : f32
    %10 = vector.broadcast %cst_8 : f32 to vector<16x16xf32>
    %11 = arith.maximumf %9, %10 : vector<16x16xf32>
    %12 = math.sqrt %11 : vector<16x16xf32>
    %13 = vector.extract_strided_slice %3 {offsets = [0, 0], sizes = [16, 4], strides = [1, 1]} : vector<16x8xf32> to vector<16x4xf32>
    %14 = vector.extract_strided_slice %4 {offsets = [0, 0], sizes = [4, 16], strides = [1, 1]} : vector<8x16xf32> to vector<4x16xf32>
    %cst_9 = arith.constant dense<0.000000e+00> : vector<16x16xf32>
    %15 = tpu.matmul %13, %14, %cst_9 {dimension_numbers = #tpu.dot_dimension_numbers<[1], [0], [0], [1], [0, 0, 1, 1], [], []>} : vector<16x4xf32>, vector<4x16xf32>, vector<16x16xf32> -> vector<16x16xf32>
    %16 = vector.extract_strided_slice %3 {offsets = [0, 4], sizes = [16, 1], strides = [1, 1]} : vector<16x8xf32> to vector<16x1xf32>
    %17 = vector.extract_strided_slice %4 {offsets = [5, 0], sizes = [1, 16], strides = [1, 1]} : vector<8x16xf32> to vector<1x16xf32>
    %18 = vector.broadcast %16 : vector<16x1xf32> to vector<16x16xf32>
    %19 = vector.broadcast %17 : vector<1x16xf32> to vector<16x16xf32>
    %20 = arith.addf %18, %19 : vector<16x16xf32>
    %cst_10 = arith.constant 2.000000e+00 : f32
    %21 = vector.broadcast %cst_10 : f32 to vector<16x16xf32>
    %22 = arith.mulf %21, %15 : vector<16x16xf32>
    %23 = arith.subf %20, %22 : vector<16x16xf32>
    %cst_11 = arith.constant 0.000000e+00 : f32
    %24 = vector.broadcast %cst_11 : f32 to vector<16x16xf32>
    %25 = arith.maximumf %23, %24 : vector<16x16xf32>
    %26 = math.sqrt %25 : vector<16x16xf32>
    %cst_12 = arith.constant 9.800000e-01 : f32
    %27 = vector.broadcast %cst_12 : f32 to vector<16x16xf32>
    %28 = arith.mulf %27, %12 : vector<16x16xf32>
    %cst_13 = arith.constant 2.000000e-02 : f32
    %29 = vector.broadcast %cst_13 : f32 to vector<16x16xf32>
    %30 = arith.mulf %29, %26 : vector<16x16xf32>
    %31 = arith.addf %28, %30 : vector<16x16xf32>
    %32 = vector.extract_strided_slice %3 {offsets = [0, 5], sizes = [16, 1], strides = [1, 1]} : vector<16x8xf32> to vector<16x1xf32>
    %cst_14 = arith.constant 5.000000e-01 : f32
    %33 = vector.broadcast %cst_14 : f32 to vector<16x1xf32>
    %34 = arith.cmpf ogt, %32, %33 : vector<16x1xf32>
    %cst_15 = arith.constant 1.000000e+10 : f32
    %35 = vector.shape_cast %34 : vector<16x1xi1> to vector<16x1xi1>
    %36 = vector.broadcast %35 : vector<16x1xi1> to vector<16x16xi1>
    %37 = vector.broadcast %cst_15 : f32 to vector<16x16xf32>
    %38 = arith.select %36, %37, %31 : vector<16x16xi1>, vector<16x16xf32>
    %c0_16 = arith.constant 0 : index
    %c0_17 = arith.constant 0 : index
    %39 = vector.load %arg6[%c0_16, %c0_17] : memref<16x16xf32, #tpu.memory_space<vmem>>, vector<16x16xf32>
    tpu.vector_store %arg6[%c0_16, %c0_17], %38 {strides = array<i32>} : memref<16x16xf32, #tpu.memory_space<vmem>>, vector<16x16xf32>,
    return
  }
  func.func @transform_0(%arg0: i32, %arg1: i32) -> (i32, i32) {
    %c0_i32 = arith.constant 0 : i32
    %c0_i32_0 = arith.constant 0 : i32
    return %arg0, %c0_i32 : i32, i32
  }
  func.func @transform_1(%arg0: i32, %arg1: i32) -> (i32, i32) {
    %c0_i32 = arith.constant 0 : i32
    %c0_i32_0 = arith.constant 0 : i32
    return %c0_i32, %arg1 : i32, i32
  }
  func.func @transform_2(%arg0: i32, %arg1: i32) -> (i32, i32) {
    %c0_i32 = arith.constant 0 : i32
    %c0_i32_0 = arith.constant 0 : i32
    return %arg0, %c0_i32 : i32, i32
  }
  func.func @transform_3(%arg0: i32, %arg1: i32) -> (i32, i32) {
    %c0_i32 = arith.constant 0 : i32
    %c0_i32_0 = arith.constant 0 : i32
    return %c0_i32, %arg1 : i32, i32
  }
  func.func @transform_4(%arg0: i32, %arg1: i32) -> (i32, i32) {
    %c0_i32 = arith.constant 0 : i32
    return %arg0, %arg1 : i32, i32
  }
}

</mosaic_0001>

<llo_original>
// kernel: _compute_cost.1
$region0: #{_compute_cost.1}
  #allocation0 [shape = 'u32[]', space=smem, size = 0x4, offset = 0x4, fixed_abs, tag = 'smem constant byte address 0x4 - core index']
  #allocation1 [shape = 'u32[144,128]{1,0:T(1,128)}', space=vmem, size = 0x12000, scoped, tag = 'internal scratch']
  %s0 = inlined_call_operand.vmem [shape: bf16[16,32], index: 0, kind: input, shape index: {}]
  %s1 = inlined_call_operand.vmem [shape: bf16[32,16], index: 1, kind: input, shape index: {}]
  %s2 = inlined_call_operand.vmem [shape: f32[16,8], index: 2, kind: input, shape index: {}]
  %s3 = inlined_call_operand.vmem [shape: f32[8,16], index: 3, kind: input, shape index: {}]
  %s4 = inlined_call_operand.hbm [shape: f32[16,16], index: 4, kind: output, shape index: {}]
  %s5 = sld [smem:[#allocation0]]
  $region26: #{_compute_cost.1} parent=0
    _
  %s7 = ssub.s32 1, %s5
  %s8 = scalar_select 0, %s7, %s5
  $region1: #{_compute_cost.1} parent=0
    #allocation2 [shape = 'u8[8192]{0}', space=vmem, size = 0x2000, scoped, tag = 'output window, operand 0, single buffered']
    #allocation3 [shape = 's32[1]{0}', space=sflag, size = 0x4, scoped, tag = 'scoped memory for _compute_cost.1']
    %9 = vsyncpa [#allocation3], 0
    // Predicated region
    $region2: #{_compute_cost.1} parent=1 // pred_check
      _
    $region3: #{_compute_cost.1} parent=1 // pred_check_branch
      %11 = sbr.rel (0) target = $region5
    $region4: #{_compute_cost.1} parent=1 // pred_region
      _
    $region5: #{_compute_cost.1} parent=1 // pred_fallthru
      _
    // Predicated region
    $region6: #{_compute_cost.1} parent=1 // pred_check
      _
    $region7: #{_compute_cost.1} parent=1 // pred_check_branch
      %13 = sbr.rel (0) target = $region9
    $region8: #{_compute_cost.1} parent=1 // pred_region
      _
    $region9: #{_compute_cost.1} parent=1 // pred_fallthru
      _
    // Predicated region
    $region10: #{_compute_cost.1} parent=1 // pred_check
      _
    $region11: #{_compute_cost.1} parent=1 // pred_check_branch
      %15 = sbr.rel (0) target = $region13
    $region12: #{_compute_cost.1} parent=1 // pred_region
      _
    $region13: #{_compute_cost.1} parent=1 // pred_fallthru
      _
    // Predicated region
    $region14: #{_compute_cost.1} parent=1 // pred_check
      _
    $region15: #{_compute_cost.1} parent=1 // pred_check_branch
      %17 = sbr.rel (0) target = $region17
    $region16: #{_compute_cost.1} parent=1 // pred_region
      _
    $region17: #{_compute_cost.1} parent=1 // pred_fallthru
      _
    %v19 = vld [vmem:[%s0] sm:$0xf]
    %v20 = vld [vmem:[%s0 + $0x4] sm:$0xf]
    %v21 = vld [vmem:[%s1] sm:$0xf]
    %v22 = vld [vmem:[%s1 + $0x4] sm:$0xf]
    %v23 = vld [vmem:[%s1 + $0x8] sm:$0xf]
    %v24 = vld [vmem:[%s1 + $0xc] sm:$0xf]
    %v27 = vunpack.c.l.b16 %v19
    %v28 = vunpack.c.l.b16 %v20
    %v29 = vpack.c.b16 %v28, %v27
    %v34 = vunpack.c.l.b16 %v21
    %v35 = vunpack.c.l.b16 %v22
    %v36 = vunpack.c.l.b16 %v23
    %v37 = vunpack.c.l.b16 %v24
    %v38 = vpack.c.b16 %v35, %v34
    %v39 = vpack.c.b16 %v37, %v36
    %vm42 = vcmask 261120
    %v44 = vsel %vm42, %v29, 0
    %46 = vmatprep.subr.bf16.mxu0 0
    %47 = vmatpush1.bf16.msra.mxu0 0
    %48 = vmatprep.subr.bf16.mxu0 0
    %49 = vmatpush1.bf16.msra.mxu0 0
    %50 = vmatprep.subr.bf16.mxu0 0
    %51 = vmatpush1.bf16.msra.mxu0 0
    %52 = vmatprep.subr.bf16.mxu0 0
    %53 = vmatpush1.bf16.msra.mxu0 0
    %54 = vmatprep.subr.bf16.mxu0 0
    %55 = vmatpush1.bf16.msra.mxu0 0
    %56 = vmatprep.subr.bf16.mxu0 0
    %57 = vmatpush1.bf16.msra.mxu0 0
    %58 = vmatprep.subr.bf16.mxu0 0
    %59 = vmatpush1.bf16.msra.mxu0 %v39
    %60 = vmatprep.subr.bf16.mxu0 0
    %61 = vmatpush1.bf16.msra.mxu0 %v38
    %62 = vmatprep.subr.bf16.mxu0 0
    %63 = vmatpush2.bf16.msra.mxu0 0
    %64 = vmatprep.subr.bf16.mxu0 0
    %65 = vmatpush2.bf16.msra.mxu0 0
    %66 = vmatprep.subr.bf16.mxu0 0
    %67 = vmatpush2.bf16.msra.mxu0 0
    %68 = vmatprep.subr.bf16.mxu0 0
    %69 = vmatpush2.bf16.msra.mxu0 0
    %70 = vmatprep.subr.bf16.mxu0 0
    %71 = vmatpush2.bf16.msra.mxu0 0
    %72 = vmatprep.subr.bf16.mxu0 0
    %73 = vmatpush2.bf16.msra.mxu0 0
    %74 = vmatprep.subr.bf16.mxu0 0
    %75 = vmatpush2.bf16.msra.mxu0 0
    %76 = vmatprep.subr.bf16.mxu0 0
    %77 = vmatpush2.bf16.msra.mxu0 0
    %78 = vmatprep.mubr.bf16.mxu0 0
    %79 = vmatmul.mubr.bf16.gmra.mxu0 %v44
    %v80 = vpop.f32.mrf.mxu0
    %v81 = vadd.f32 0.0, %v80
    %v82 = vpop.f32.mrf.mxu0
    %v83 = vpop.f32.mrf.mxu0
    %v84 = vadd.f32 0.0, %v83
    %v85 = vpop.f32.mrf.mxu0
    %86 = vdwg.mxu0
    %v87 = vld [vmem:[%s2] sm:$0xff]
    %v88 = vld [vmem:[%s2 + $0x8] sm:$0xff]
    %v89 = vld [vmem:[%s3] sm:$0xff]
    %v90 = vsub.f32 1.0, %v81
    %v91 = vsub.f32 1.0, %v84
    %v92 = vlaneseq
    %v93 = vshrl.u32 %v92, 7
    %v94 = vsub.s32 4, %v93
    %v95 = vrot.slane %v89, %v94
    %v96 = vmul.f32 %v95, %v90
    %v97 = vmul.f32 %v95, %v91
    %v98 = vmax.f32 %v96, 0.0
    %v99 = vmax.f32 %v97, 0.0
    %v100 = vrsqrt.pop %v98
    %v101 = vmul.f32 %v98, %v100
    %vm102 = vcmp.eq.f32.partialorder %v98, inf
    %v103 = vsel %vm102, %v98, %v101
    %vm104 = vcmp.eq.f32.partialorder %v98, 0.0
    %v105 = vand.u32 %v98, 2147483648
    %v106 = vsel %vm104, %v105, %v103
    %v107 = vrsqrt.pop %v99
    %v108 = vmul.f32 %v99, %v107
    %vm109 = vcmp.eq.f32.partialorder %v99, inf
    %v110 = vsel %vm109, %v99, %v108
    %vm111 = vcmp.eq.f32.partialorder %v99, 0.0
    %v112 = vand.u32 %v99, 2147483648
    %v113 = vsel %vm111, %v112, %v110
    %vm114 = vcmask 31744
    %v116 = vsel %vm114, %v87, 0
    %v119 = vsel %vm114, %v88, 0
    %vm121 = vcmask 1043456
    %v123 = vsel %vm121, %v89, 0
    %125 = vmatprep.subr.mxu0 0.0
    %126 = vmatpush1.msra.mxu0 0.0
    %127 = vmatprep.subr.mxu0 0.0
    %128 = vmatpush1.msra.mxu0 0.0
    %129 = vmatprep.subr.mxu0 0.0
    %130 = vmatpush1.msra.mxu0 0.0
    %131 = vmatprep.subr.mxu0 0.0
    %132 = vmatpush1.msra.mxu0 0.0
    %133 = vmatprep.subr.mxu0 0.0
    %134 = vmatpush1.msra.mxu0 0.0
    %135 = vmatprep.subr.mxu0 0.0
    %136 = vmatpush1.msra.mxu0 0.0
    %137 = vmatprep.subr.mxu0 0.0
    %138 = vmatpush1.msra.mxu0 0.0
    %139 = vmatprep.subr.mxu0 0.0
    %140 = vmatpush1.msra.mxu0 0.0
    %141 = vmatprep.subr.mxu0 0.0
    %142 = vmatpush1.msra.mxu0 0.0
    %143 = vmatprep.subr.mxu0 0.0
    %144 = vmatpush1.msra.mxu0 0.0
    %145 = vmatprep.subr.mxu0 0.0
    %146 = vmatpush1.msra.mxu0 0.0
    %147 = vmatprep.subr.mxu0 0.0
    %148 = vmatpush1.msra.mxu0 0.0
    %149 = vmatprep.subr.mxu0 0.0
    %150 = vmatpush1.msra.mxu0 0.0
    %151 = vmatprep.subr.mxu0 0.0
    %152 = vmatpush1.msra.mxu0 0.0
    %153 = vmatprep.subr.mxu0 0.0
    %154 = vmatpush1.msra.mxu0 0.0
    %155 = vmatprep.subr.mxu0 0.0
    %156 = vmatpush1.msra.mxu0 %v123
    %157 = vmatprep.subr.mxu0 0.0
    %158 = vmatpush2.msra.mxu0 0.0
    %159 = vmatprep.subr.mxu0 0.0
    %160 = vmatpush2.msra.mxu0 0.0
    %161 = vmatprep.subr.mxu0 0.0
    %162 = vmatpush2.msra.mxu0 0.0
    %163 = vmatprep.subr.mxu0 0.0
    %164 = vmatpush2.msra.mxu0 0.0
    %165 = vmatprep.subr.mxu0 0.0
    %166 = vmatpush2.msra.mxu0 0.0
    %167 = vmatprep.subr.mxu0 0.0
    %168 = vmatpush2.msra.mxu0 0.0
    %169 = vmatprep.subr.mxu0 0.0
    %170 = vmatpush2.msra.mxu0 0.0
    %171 = vmatprep.subr.mxu0 0.0
    %172 = vmatpush2.msra.mxu0 0.0
    %173 = vmatprep.subr.mxu0 0.0
    %174 = vmatpush2.msra.mxu0 0.0
    %175 = vmatprep.subr.mxu0 0.0
    %176 = vmatpush2.msra.mxu0 0.0
    %177 = vmatprep.subr.mxu0 0.0
    %178 = vmatpush2.msra.mxu0 0.0
    %179 = vmatprep.subr.mxu0 0.0
    %180 = vmatpush2.msra.mxu0 0.0
    %181 = vmatprep.subr.mxu0 0.0
    %182 = vmatpush2.msra.mxu0 0.0
    %183 = vmatprep.subr.mxu0 0.0
    %184 = vmatpush2.msra.mxu0 0.0
    %185 = vmatprep.subr.mxu0 0.0
    %186 = vmatpush2.msra.mxu0 0.0
    %187 = vmatprep.subr.mxu0 0.0
    %188 = vmatpush2.msra.mxu0 0.0
    %189 = vmatprep.mubr.f32.mxu0 0.0
    %190 = vmatmul.mubr.f32.gmra.mxu0 %v116
    %v191 = vpop.f32.mrf.mxu0
    %v192 = vadd.f32 0.0, %v191
    %v193 = vpop.f32.mrf.mxu0
    %194 = vmatprep.mubr.f32.mxu0 0.0
    %195 = vmatmul.mubr.f32.gmra.mxu0 %v119
    %v196 = vpop.f32.mrf.mxu0
    %v197 = vadd.f32 0.0, %v196
    %v198 = vpop.f32.mrf.mxu0
    %199 = vdwg.mxu0
    %200 = vset.pattern.permute.xlu0 4
    %201 = vperm.xlu0 %200, %v87
    %v202 = vpop.permute.xlu0 %201
    %204 = vset.pattern.permute.xlu0 4
    %205 = vperm.xlu0 %204, %v88
    %v206 = vpop.permute.xlu0 %205
    %v208 = vlaneseq
    %v209 = vshrl.u32 %v208, 7
    %v210 = vsub.s32 5, %v209
    %v211 = vrot.slane %v89, %v210
    %v212 = vadd.f32 %v202, %v211
    %v213 = vadd.f32 %v206, %v211
    %v214 = vmul.f32 %v192, 2.0
    %v215 = vmul.f32 %v197, 2.0
    %v216 = vsub.f32 %v212, %v214
    %v217 = vsub.f32 %v213, %v215
    %v218 = vmax.f32 %v216, 0.0
    %v219 = vmax.f32 %v217, 0.0
    %v220 = vrsqrt.pop %v218
    %v221 = vmul.f32 %v218, %v220
    %vm222 = vcmp.eq.f32.partialorder %v218, inf
    %v223 = vsel %vm222, %v218, %v221
    %vm224 = vcmp.eq.f32.partialorder %v218, 0.0
    %v225 = vand.u32 %v218, 2147483648
    %v226 = vsel %vm224, %v225, %v223
    %v227 = vrsqrt.pop %v219
    %v228 = vmul.f32 %v219, %v227
    %vm229 = vcmp.eq.f32.partialorder %v219, inf
    %v230 = vsel %vm229, %v219, %v228
    %vm231 = vcmp.eq.f32.partialorder %v219, 0.0
    %v232 = vand.u32 %v219, 2147483648
    %v233 = vsel %vm231, %v232, %v230
    %v234 = vmul.f32 %v106, 0.98
    %v235 = vmul.f32 %v113, 0.98
    %v236 = vmul.f32 %v226, 0.02
    %v237 = vmul.f32 %v233, 0.02
    %v238 = vadd.f32 %v234, %v236
    %v239 = vadd.f32 %v235, %v237
    %vm240 = vcmp.gt.f32.partialorder %v87, 0.5
    %vm241 = vcmp.gt.f32.partialorder %v88, 0.5
    %v242 = vsel %vm240, 1, 0
    %v243 = vsel %vm241, 1, 0
    %244 = vset.pattern.permute.xlu0 5
    %245 = vperm.xlu0 %244, %v242
    %v246 = vpop.permute.xlu0 %245
    %247 = vset.pattern.permute.xlu0 5
    %248 = vperm.xlu0 %247, %v243
    %v249 = vpop.permute.xlu0 %248
    %vm250 = vcmp.eq.s32.totalorder %v246, 1
    %vm251 = vcmp.eq.s32.totalorder %v249, 1
    %v252 = vsel %vm250, 1e+10, %v238
    %v253 = vsel %vm251, 1e+10, %v239
    %vm254 = vcmask 130048
    %255 = vst.msk [vmem:[#allocation2] sm:$0xff] %vm254, %v252
    %256 = vst.msk [vmem:[#allocation2 + $0x8] sm:$0xff] %vm254, %v253
    // Predicated region
    $region18: #{_compute_cost.1} parent=1 // pred_check
      _
    $region19: #{_compute_cost.1} parent=1 // pred_check_branch
      %258 = sbr.rel (0) target = $region21
    $region20: #{_compute_cost.1} parent=1 // pred_region
      %s260 = ssub.s32 256, 256
      %261 = vsyncadd [#allocation3], %s260
      %s262 = sshll.u32 [#allocation2], 4
      %s263 = int_to_ptr.vmem [resolvable:$true] %s262
      %268 = dma.vmem_to_hbm [thread:$0]  %s263, 256, %s4, [#allocation3], 128, 128, 8
    $region21: #{_compute_cost.1} parent=1 // pred_fallthru
      _
    // Predicated region
    $region22: #{_compute_cost.1} parent=1 // pred_check
      _
    $region23: #{_compute_cost.1} parent=1 // pred_check_branch
      %270 = sbr.rel (0) target = $region25
    $region24: #{_compute_cost.1} parent=1 // pred_region
      %271 = dma.done [#allocation3], 256
    $region25: #{_compute_cost.1} parent=1 // pred_fallthru
      _
    %272 = vsyncpa [#allocation3], 1

</llo_original>
